<compile_context>
chip_gen: v7x
topology: tpu7x:2x2x1
jax: 0.10.0
libtpu: 0.0.40
codegen_flags: <defaults>
</compile_context>

<pallas_src>
import math
from functools import partial

import jax
import jax.numpy as jnp
from jax.experimental import pallas as pl
from jax.experimental.pallas import tpu as pltpu


# ----------------------------------------------------------------------------
# Tile selection: largest multiple-of-128 tile dividing P, capped at max_tp,
# preferring >= 2 grid steps (v7x has two TensorCores; v5e/v6e have one).
# ----------------------------------------------------------------------------
def _choose_tp(P, max_tp=512):
    divisors = [t for t in (512, 256, 128) if t <= max_tp and P % t == 0]
    for t in divisors:
        if P // t >= 2:
            return t
    if divisors:
        return divisors[-1]
    return P  # full-width block (block dim == array dim is always allowed)


_VMEM_LIMIT = 32 * 1024 * 1024  # explicit; safe on 64-MiB v7x parts


# ----------------------------------------------------------------------------
# Fused kernel: Q head projection + per-pixel low-rank covariance.
#
#   head[n, o, k] = sum_c w[o, c] * x[n, c, k] + b[o]          (MXU dot per n)
#   mean[n, k]    = head[n, 0, k]
#   fac[n, j, k]  = head[n, 1+j, k]            (1/sqrt(L) folded into w rows)
#   diag[n, k]    = exp(head[n, 1+L, k])
#   logv[n, k]    = head[n, 2+L, k]
#   cov[i, m, k]  = sum_j fac[i, j, k] * fac[m, j, k]  (+ diag[i, k] if i == m)
#
# Equivalent (up to the final (0,2,1) transpose done in XLA) to
# torch.einsum('ijk,mjk->ikm', a, a)/L followed by the per-sample diagonal add
# in FVI.q_params.
# ----------------------------------------------------------------------------
def _fused_q_kernel(x_ref, w_ref, b_ref, mean_ref, cov_ref, logvar_ref, *, L):
    w = w_ref[...]                                   # (Cout, C)
    b = b_ref[...]                                   # (Cout, 1)
    N = x_ref.shape[0]

    facs = []                                        # each (L, tp)
    diags = []                                       # each (1, tp)
    for n in range(N):                               # static unroll, N small
        # MXU contraction over channels for this sample's pixel tile.
        h = jnp.dot(w, x_ref[n], preferred_element_type=jnp.float32) + b
        mean_ref[n : n + 1, :] = h[0:1, :]
        logvar_ref[n : n + 1, :] = h[2 + L : 3 + L, :]
        facs.append(h[1 : 1 + L, :])
        diags.append(jnp.exp(h[1 + L : 2 + L, :]))

    # Symmetric per-pixel covariance: compute i <= m, mirror, add diag per row.
    for i in range(N):
        for m in range(i, N):
            v = jnp.sum(facs[i] * facs[m], axis=0, keepdims=True)  # (1, tp)
            if i == m:
                cov_ref[i, m : m + 1, :] = v + diags[i]
            else:
                cov_ref[i, m : m + 1, :] = v
                cov_ref[m, i : i + 1, :] = v


def fused_q_head_cov(x_ncp, w, b, L, *, max_tp=512):
    N, C, P = x_ncp.shape
    Cout = w.shape[0]
    tp = _choose_tp(P, max_tp)
    kernel = partial(_fused_q_kernel, L=L)
    return pl.pallas_call(
        kernel,
        out_shape=(
            jax.ShapeDtypeStruct((N, P), jnp.float32),      # q_mean
            jax.ShapeDtypeStruct((N, N, P), jnp.float32),   # cov (N, N, P)
            jax.ShapeDtypeStruct((N, P), jnp.float32),      # q_logvar
        ),
        grid=(P // tp,),
        in_specs=[
            pl.BlockSpec((N, C, tp), lambda p: (0, 0, p)),
            pl.BlockSpec((Cout, C), lambda p: (0, 0)),
            pl.BlockSpec((Cout, 1), lambda p: (0, 0)),
        ],
        out_specs=(
            pl.BlockSpec((N, tp), lambda p: (0, p)),
            pl.BlockSpec((N, N, tp), lambda p: (0, 0, p)),
            pl.BlockSpec((N, tp), lambda p: (0, p)),
        ),
        compiler_params=pltpu.CompilerParams(
            dimension_semantics=("parallel",),
            vmem_limit_bytes=_VMEM_LIMIT,
        ),
    )(x_ncp, w, b)


# ----------------------------------------------------------------------------
# Prior kernel: per-pixel linear-kernel covariance with compile-time jitter.
#   cov[i, m, k] = (1/C) * sum_c x[i, c, k] * x[m, c, k]   (+ jitter if i == m)
# No log-jitter array DMA, no in-kernel exp (jitter is a constant).
# ----------------------------------------------------------------------------
def _prior_cov_kernel(x_ref, cov_ref, *, inv_scale, jitter):
    N = x_ref.shape[0]
    xs = [x_ref[n] for n in range(N)]                # each (C, tp)
    for i in range(N):
        for m in range(i, N):
            v = jnp.sum(xs[i] * xs[m], axis=0, keepdims=True) * inv_scale
            if i == m:
                cov_ref[i, m : m + 1, :] = v + jitter
            else:
                cov_ref[i, m : m + 1, :] = v
                cov_ref[m, i : i + 1, :] = v


def prior_cov(x_ncp, *, jitter=1e-3, max_tp=512):
    N, C, P = x_ncp.shape
    tp = _choose_tp(P, max_tp)
    kernel = partial(_prior_cov_kernel, inv_scale=1.0 / C, jitter=float(jitter))
    return pl.pallas_call(
        kernel,
        out_shape=jax.ShapeDtypeStruct((N, N, P), jnp.float32),
        grid=(P // tp,),
        in_specs=[pl.BlockSpec((N, C, tp), lambda p: (0, 0, p))],
        out_specs=pl.BlockSpec((N, N, tp), lambda p: (0, 0, p)),
        compiler_params=pltpu.CompilerParams(
            dimension_semantics=("parallel",),
            vmem_limit_bytes=_VMEM_LIMIT,
        ),
    )(x_ncp)


# ----------------------------------------------------------------------------
# FVI module
# ----------------------------------------------------------------------------
class FVIPallas:
    def __init__(self, x_size, *, n_inducing, x_inducing_var, key, L=20):
        self.x_size = x_size           # (C, H, W)
        self.L = L
        self.n_inducing = n_inducing
        self.x_inducing_var = x_inducing_var
        C = x_size[0]
        Cout = L + 3                   # [mean | L cov factors | cov diag | logvar]
        kw, kb = jax.random.split(key)
        # Deterministic synthetic Q-head parameters (stand-in for Q_FCDenseNet103_FVI).
        q_w = 0.1 * jax.random.normal(kw, (Cout, C), jnp.float32)
        q_b = 0.01 * jax.random.normal(kb, (Cout, 1), jnp.float32)
        # Fold the 1/L covariance scale (einsum(...)/L) into the L cov-factor
        # rows:  (s*a)(s*a)^T = s^2 * a a^T  with  s = 1/sqrt(L).  Mean, diag
        # and logvar rows are untouched, so semantics are unchanged.
        scale = jnp.ones((Cout, 1), jnp.float32).at[1 : 1 + L].set(
            1.0 / math.sqrt(L)
        )
        self.q_w = q_w * scale
        self.q_b = q_b * scale

    # ---- FVI._generate_x_c ----
    def _generate_x_c(self, x_t, key):
        base = x_t[: self.n_inducing]
        randn = math.sqrt(self.x_inducing_var) * jax.random.normal(
            key, base.shape, base.dtype
        )
        return jnp.clip(base + randn, 0.0, 1.0)

    # ---- FVI.q_params (Q net stood in by the fused Pallas kernel) ----
    def q_params(self, x):
        N, C, H, W = x.shape
        P = H * W
        x_ncp = x.reshape(N, C, P)
        q_mean, cov_nnp, q_logvar = fused_q_head_cov(
            x_ncp, self.q_w, self.q_b, self.L
        )
        # Reference layout (N, P, N); transpose stays in XLA so the Pallas
        # output remains lane-dense (..., P).
        q_cov = jnp.transpose(cov_nnp, (0, 2, 1))
        return q_mean, q_cov, q_logvar

    # ---- FVI.q_FVI ----
    def q_FVI(self, x_t, x_c):
        N_t = x_t.shape[0]
        x = jnp.concatenate([x_t, x_c], axis=0) if x_c is not None else x_t
        q_mean, q_cov, q_logvar = self.q_params(x)
        return q_mean, q_cov, q_logvar[:N_t]

    # ---- f_prior_BNN stand-in ----
    def prior(self, x_t, x_c):
        x = jnp.concatenate([x_t, x_c], axis=0)
        N, C, H, W = x.shape
        P = H * W
        x_ncp = x.reshape(N, C, P)
        cov_nnp = prior_cov(x_ncp, jitter=1e-3)       # (N, N, P)
        prior_cov_out = jnp.transpose(cov_nnp, (0, 2, 1))  # (N, P, N)
        prior_mean = jnp.zeros((N, P), jnp.float32)
        return prior_mean, prior_cov_out

    # ---- FVI.forward ----
    def __call__(self, x_t, key):
        x_c = self._generate_x_c(x_t, key)
        q_mean, q_cov, lik_logvar = self.q_FVI(x_t, x_c)
        prior_mean, prior_cov_out = self.prior(x_t, x_c)
        return lik_logvar, q_mean, q_cov, prior_mean, prior_cov_out


if __name__ == "__main__":
    key = jax.random.PRNGKey(0)
    k_x, k_noise, k_param = jax.random.split(key, 3)

    N_t, C, H, W = 2, 3, 16, 16
    n_inducing = 2
    x_t = jax.random.uniform(k_x, (N_t, C, H, W), jnp.float32)

    model = FVIPallas((C, H, W), n_inducing=n_inducing,
                      x_inducing_var=0.1, key=k_param)

    outs = model(x_t, k_noise)
    outs = jax.block_until_ready(outs)

    lik_logvar, q_mean, q_cov, prior_mean, prior_cov_out = outs
    N = N_t + n_inducing
    P = H * W
    assert lik_logvar.shape == (N_t, P)
    assert q_mean.shape == (N, P)
    assert q_cov.shape == (N, P, N)
    assert prior_mean.shape == (N, P)
    assert prior_cov_out.shape == (N, P, N)
    assert all(jnp.isfinite(o).all() for o in outs)
    # covariance symmetry sanity check: cov[i, :, m] == cov[m, :, i]
    assert jnp.allclose(q_cov, jnp.transpose(q_cov, (2, 1, 0)), atol=1e-5)
    assert jnp.allclose(prior_cov_out, jnp.transpose(prior_cov_out, (2, 1, 0)),
                        atol=1e-5)

    print("KERNEL_OK")
</pallas_src>

<mosaic_0001>
module attributes {stable_mosaic.version = 11 : i64} {
  func.func @_fused_q_kernel(%arg0: i32, %arg1: memref<4x3x128xf32, #tpu.memory_space<vmem>>, %arg2: memref<23x3xf32, #tpu.memory_space<vmem>>, %arg3: memref<23x1xf32, #tpu.memory_space<vmem>>, %arg4: memref<4x128xf32, #tpu.memory_space<vmem>>, %arg5: memref<4x4x128xf32, #tpu.memory_space<vmem>>, %arg6: memref<4x128xf32, #tpu.memory_space<vmem>>) attributes {dimension_semantics = [#tpu.dimension_semantics<parallel>], iteration_bounds = array<i64: 2>, scalar_prefetch = 0 : i64, scratch_operands = 0 : i64, tpu.core_type = #tpu.core_type<tc>, window_params = [{transform_indices = @transform_0, window_bounds = array<i64: 4, 3, 128>}, {pipeline_mode = #tpu.pipeline_mode<synchronous>, transform_indices = @transform_1, window_bounds = array<i64: 23, 3>}, {pipeline_mode = #tpu.pipeline_mode<synchronous>, transform_indices = @transform_2, window_bounds = array<i64: 23, 1>}, {transform_indices = @transform_3, window_bounds = array<i64: 4, 128>}, {transform_indices = @transform_4, window_bounds = array<i64: 4, 4, 128>}, {transform_indices = @transform_5, window_bounds = array<i64: 4, 128>}]} {
    %c0 = arith.constant 0 : index
    %c0_0 = arith.constant 0 : index
    %0 = vector.load %arg2[%c0, %c0_0] : memref<23x3xf32, #tpu.memory_space<vmem>>, vector<23x3xf32>
    %c0_1 = arith.constant 0 : index
    %c0_2 = arith.constant 0 : index
    %1 = vector.load %arg3[%c0_1, %c0_2] : memref<23x1xf32, #tpu.memory_space<vmem>>, vector<23x1xf32>
    %c0_3 = arith.constant 0 : index
    %c0_4 = arith.constant 0 : index
    %c0_5 = arith.constant 0 : index
    %2 = vector.load %arg1[%c0_3, %c0_4, %c0_5] : memref<4x3x128xf32, #tpu.memory_space<vmem>>, vector<1x3x128xf32>
    %3 = vector.shape_cast %2 : vector<1x3x128xf32> to vector<3x128xf32>
    %cst = arith.constant dense<0.000000e+00> : vector<23x128xf32>
    %4 = tpu.matmul %0, %3, %cst {dimension_numbers = #tpu.dot_dimension_numbers<[1], [0], [0], [1], [0, 0, 1, 1], [], []>} : vector<23x3xf32>, vector<3x128xf32>, vector<23x128xf32> -> vector<23x128xf32>
    %5 = vector.broadcast %1 : vector<23x1xf32> to vector<23x128xf32>
    %6 = arith.addf %4, %5 : vector<23x128xf32>
    %7 = vector.extract_strided_slice %6 {offsets = [0, 0], sizes = [1, 128], strides = [1, 1]} : vector<23x128xf32> to vector<1x128xf32>
    %c0_6 = arith.constant 0 : index
    %c0_7 = arith.constant 0 : index
    %8 = vector.load %arg4[%c0_6, %c0_7] : memref<4x128xf32, #tpu.memory_space<vmem>>, vector<1x128xf32>
    tpu.vector_store %arg4[%c0_6, %c0_7], %7 {strides = array<i32>} : memref<4x128xf32, #tpu.memory_space<vmem>>, vector<1x128xf32>,
    %9 = vector.extract_strided_slice %6 {offsets = [22, 0], sizes = [1, 128], strides = [1, 1]} : vector<23x128xf32> to vector<1x128xf32>
    %c0_8 = arith.constant 0 : index
    %c0_9 = arith.constant 0 : index
    %10 = vector.load %arg6[%c0_8, %c0_9] : memref<4x128xf32, #tpu.memory_space<vmem>>, vector<1x128xf32>
    tpu.vector_store %arg6[%c0_8, %c0_9], %9 {strides = array<i32>} : memref<4x128xf32, #tpu.memory_space<vmem>>, vector<1x128xf32>,
    %11 = vector.extract_strided_slice %6 {offsets = [1, 0], sizes = [20, 128], strides = [1, 1]} : vector<23x128xf32> to vector<20x128xf32>
    %12 = vector.extract_strided_slice %6 {offsets = [21, 0], sizes = [1, 128], strides = [1, 1]} : vector<23x128xf32> to vector<1x128xf32>
    %13 = math.exp %12 : vector<1x128xf32>
    %c1 = arith.constant 1 : index
    %c0_10 = arith.constant 0 : index
    %c0_11 = arith.constant 0 : index
    %14 = vector.load %arg1[%c1, %c0_10, %c0_11] : memref<4x3x128xf32, #tpu.memory_space<vmem>>, vector<1x3x128xf32>
    %15 = vector.shape_cast %14 : vector<1x3x128xf32> to vector<3x128xf32>
    %cst_12 = arith.constant dense<0.000000e+00> : vector<23x128xf32>
    %16 = tpu.matmul %0, %15, %cst_12 {dimension_numbers = #tpu.dot_dimension_numbers<[1], [0], [0], [1], [0, 0, 1, 1], [], []>} : vector<23x3xf32>, vector<3x128xf32>, vector<23x128xf32> -> vector<23x128xf32>
    %17 = vector.broadcast %1 : vector<23x1xf32> to vector<23x128xf32>
    %18 = arith.addf %16, %17 : vector<23x128xf32>
    %19 = vector.extract_strided_slice %18 {offsets = [0, 0], sizes = [1, 128], strides = [1, 1]} : vector<23x128xf32> to vector<1x128xf32>
    %c1_13 = arith.constant 1 : index
    %c0_14 = arith.constant 0 : index
    %20 = vector.load %arg4[%c1_13, %c0_14] : memref<4x128xf32, #tpu.memory_space<vmem>>, vector<1x128xf32>
    tpu.vector_store %arg4[%c1_13, %c0_14], %19 {strides = array<i32>} : memref<4x128xf32, #tpu.memory_space<vmem>>, vector<1x128xf32>,
    %21 = vector.extract_strided_slice %18 {offsets = [22, 0], sizes = [1, 128], strides = [1, 1]} : vector<23x128xf32> to vector<1x128xf32>
    %c1_15 = arith.constant 1 : index
    %c0_16 = arith.constant 0 : index
    %22 = vector.load %arg6[%c1_15, %c0_16] : memref<4x128xf32, #tpu.memory_space<vmem>>, vector<1x128xf32>
    tpu.vector_store %arg6[%c1_15, %c0_16], %21 {strides = array<i32>} : memref<4x128xf32, #tpu.memory_space<vmem>>, vector<1x128xf32>,
    %23 = vector.extract_strided_slice %18 {offsets = [1, 0], sizes = [20, 128], strides = [1, 1]} : vector<23x128xf32> to vector<20x128xf32>
    %24 = vector.extract_strided_slice %18 {offsets = [21, 0], sizes = [1, 128], strides = [1, 1]} : vector<23x128xf32> to vector<1x128xf32>
    %25 = math.exp %24 : vector<1x128xf32>
    %c2 = arith.constant 2 : index
    %c0_17 = arith.constant 0 : index
    %c0_18 = arith.constant 0 : index
    %26 = vector.load %arg1[%c2, %c0_17, %c0_18] : memref<4x3x128xf32, #tpu.memory_space<vmem>>, vector<1x3x128xf32>
    %27 = vector.shape_cast %26 : vector<1x3x128xf32> to vector<3x128xf32>
    %cst_19 = arith.constant dense<0.000000e+00> : vector<23x128xf32>
    %28 = tpu.matmul %0, %27, %cst_19 {dimension_numbers = #tpu.dot_dimension_numbers<[1], [0], [0], [1], [0, 0, 1, 1], [], []>} : vector<23x3xf32>, vector<3x128xf32>, vector<23x128xf32> -> vector<23x128xf32>
    %29 = vector.broadcast %1 : vector<23x1xf32> to vector<23x128xf32>
    %30 = arith.addf %28, %29 : vector<23x128xf32>
    %31 = vector.extract_strided_slice %30 {offsets = [0, 0], sizes = [1, 128], strides = [1, 1]} : vector<23x128xf32> to vector<1x128xf32>
    %c2_20 = arith.constant 2 : index
    %c0_21 = arith.constant 0 : index
    %32 = vector.load %arg4[%c2_20, %c0_21] : memref<4x128xf32, #tpu.memory_space<vmem>>, vector<1x128xf32>
    tpu.vector_store %arg4[%c2_20, %c0_21], %31 {strides = array<i32>} : memref<4x128xf32, #tpu.memory_space<vmem>>, vector<1x128xf32>,
    %33 = vector.extract_strided_slice %30 {offsets = [22, 0], sizes = [1, 128], strides = [1, 1]} : vector<23x128xf32> to vector<1x128xf32>
    %c2_22 = arith.constant 2 : index
    %c0_23 = arith.constant 0 : index
    %34 = vector.load %arg6[%c2_22, %c0_23] : memref<4x128xf32, #tpu.memory_space<vmem>>, vector<1x128xf32>
    tpu.vector_store %arg6[%c2_22, %c0_23], %33 {strides = array<i32>} : memref<4x128xf32, #tpu.memory_space<vmem>>, vector<1x128xf32>,
    %35 = vector.extract_strided_slice %30 {offsets = [1, 0], sizes = [20, 128], strides = [1, 1]} : vector<23x128xf32> to vector<20x128xf32>
    %36 = vector.extract_strided_slice %30 {offsets = [21, 0], sizes = [1, 128], strides = [1, 1]} : vector<23x128xf32> to vector<1x128xf32>
    %37 = math.exp %36 : vector<1x128xf32>
    %c3 = arith.constant 3 : index
    %c0_24 = arith.constant 0 : index
    %c0_25 = arith.constant 0 : index
    %38 = vector.load %arg1[%c3, %c0_24, %c0_25] : memref<4x3x128xf32, #tpu.memory_space<vmem>>, vector<1x3x128xf32>
    %39 = vector.shape_cast %38 : vector<1x3x128xf32> to vector<3x128xf32>
    %cst_26 = arith.constant dense<0.000000e+00> : vector<23x128xf32>
    %40 = tpu.matmul %0, %39, %cst_26 {dimension_numbers = #tpu.dot_dimension_numbers<[1], [0], [0], [1], [0, 0, 1, 1], [], []>} : vector<23x3xf32>, vector<3x128xf32>, vector<23x128xf32> -> vector<23x128xf32>
    %41 = vector.broadcast %1 : vector<23x1xf32> to vector<23x128xf32>
    %42 = arith.addf %40, %41 : vector<23x128xf32>
    %43 = vector.extract_strided_slice %42 {offsets = [0, 0], sizes = [1, 128], strides = [1, 1]} : vector<23x128xf32> to vector<1x128xf32>
    %c3_27 = arith.constant 3 : index
    %c0_28 = arith.constant 0 : index
    %44 = vector.load %arg4[%c3_27, %c0_28] : memref<4x128xf32, #tpu.memory_space<vmem>>, vector<1x128xf32>
    tpu.vector_store %arg4[%c3_27, %c0_28], %43 {strides = array<i32>} : memref<4x128xf32, #tpu.memory_space<vmem>>, vector<1x128xf32>,
    %45 = vector.extract_strided_slice %42 {offsets = [22, 0], sizes = [1, 128], strides = [1, 1]} : vector<23x128xf32> to vector<1x128xf32>
    %c3_29 = arith.constant 3 : index
    %c0_30 = arith.constant 0 : index
    %46 = vector.load %arg6[%c3_29, %c0_30] : memref<4x128xf32, #tpu.memory_space<vmem>>, vector<1x128xf32>
    tpu.vector_store %arg6[%c3_29, %c0_30], %45 {strides = array<i32>} : memref<4x128xf32, #tpu.memory_space<vmem>>, vector<1x128xf32>,
    %47 = vector.extract_strided_slice %42 {offsets = [1, 0], sizes = [20, 128], strides = [1, 1]} : vector<23x128xf32> to vector<20x128xf32>
    %48 = vector.extract_strided_slice %42 {offsets = [21, 0], sizes = [1, 128], strides = [1, 1]} : vector<23x128xf32> to vector<1x128xf32>
    %49 = math.exp %48 : vector<1x128xf32>
    %50 = arith.mulf %11, %11 : vector<20x128xf32>
    %cst_31 = arith.constant dense<0.000000e+00> : vector<128xf32>
    %51 = vector.multi_reduction <add>, %50, %cst_31 [0] : vector<20x128xf32> to vector<128xf32>
    %52 = vector.shape_cast %51 : vector<128xf32> to vector<1x128xf32>
    %53 = arith.addf %52, %13 : vector<1x128xf32>
    %c0_32 = arith.constant 0 : index
    %c0_33 = arith.constant 0 : index
    %c0_34 = arith.constant 0 : index
    %54 = vector.load %arg5[%c0_32, %c0_33, %c0_34] : memref<4x4x128xf32, #tpu.memory_space<vmem>>, vector<1x1x128xf32>
    %55 = vector.shape_cast %54 : vector<1x1x128xf32> to vector<1x128xf32>
    %56 = vector.shape_cast %53 : vector<1x128xf32> to vector<1x1x128xf32>
    tpu.vector_store %arg5[%c0_32, %c0_33, %c0_34], %56 {strides = array<i32>} : memref<4x4x128xf32, #tpu.memory_space<vmem>>, vector<1x1x128xf32>,
    %57 = arith.mulf %11, %23 : vector<20x128xf32>
    %cst_35 = arith.constant dense<0.000000e+00> : vector<128xf32>
    %58 = vector.multi_reduction <add>, %57, %cst_35 [0] : vector<20x128xf32> to vector<128xf32>
    %59 = vector.shape_cast %58 : vector<128xf32> to vector<1x128xf32>
    %c0_36 = arith.constant 0 : index
    %c1_37 = arith.constant 1 : index
    %c0_38 = arith.constant 0 : index
    %60 = vector.load %arg5[%c0_36, %c1_37, %c0_38] : memref<4x4x128xf32, #tpu.memory_space<vmem>>, vector<1x1x128xf32>
    %61 = vector.shape_cast %60 : vector<1x1x128xf32> to vector<1x128xf32>
    %62 = vector.shape_cast %59 : vector<1x128xf32> to vector<1x1x128xf32>
    tpu.vector_store %arg5[%c0_36, %c1_37, %c0_38], %62 {strides = array<i32>} : memref<4x4x128xf32, #tpu.memory_space<vmem>>, vector<1x1x128xf32>,
    %c1_39 = arith.constant 1 : index
    %c0_40 = arith.constant 0 : index
    %c0_41 = arith.constant 0 : index
    %63 = vector.load %arg5[%c1_39, %c0_40, %c0_41] : memref<4x4x128xf32, #tpu.memory_space<vmem>>, vector<1x1x128xf32>
    %64 = vector.shape_cast %63 : vector<1x1x128xf32> to vector<1x128xf32>
    %65 = vector.shape_cast %59 : vector<1x128xf32> to vector<1x1x128xf32>
    tpu.vector_store %arg5[%c1_39, %c0_40, %c0_41], %65 {strides = array<i32>} : memref<4x4x128xf32, #tpu.memory_space<vmem>>, vector<1x1x128xf32>,
    %66 = arith.mulf %11, %35 : vector<20x128xf32>
    %cst_42 = arith.constant dense<0.000000e+00> : vector<128xf32>
    %67 = vector.multi_reduction <add>, %66, %cst_42 [0] : vector<20x128xf32> to vector<128xf32>
    %68 = vector.shape_cast %67 : vector<128xf32> to vector<1x128xf32>
    %c0_43 = arith.constant 0 : index
    %c2_44 = arith.constant 2 : index
    %c0_45 = arith.constant 0 : index
    %69 = vector.load %arg5[%c0_43, %c2_44, %c0_45] : memref<4x4x128xf32, #tpu.memory_space<vmem>>, vector<1x1x128xf32>
    %70 = vector.shape_cast %69 : vector<1x1x128xf32> to vector<1x128xf32>
    %71 = vector.shape_cast %68 : vector<1x128xf32> to vector<1x1x128xf32>
    tpu.vector_store %arg5[%c0_43, %c2_44, %c0_45], %71 {strides = array<i32>} : memref<4x4x128xf32, #tpu.memory_space<vmem>>, vector<1x1x128xf32>,
    %c2_46 = arith.constant 2 : index
    %c0_47 = arith.constant 0 : index
    %c0_48 = arith.constant 0 : index
    %72 = vector.load %arg5[%c2_46, %c0_47, %c0_48] : memref<4x4x128xf32, #tpu.memory_space<vmem>>, vector<1x1x128xf32>
    %73 = vector.shape_cast %72 : vector<1x1x128xf32> to vector<1x128xf32>
    %74 = vector.shape_cast %68 : vector<1x128xf32> to vector<1x1x128xf32>
    tpu.vector_store %arg5[%c2_46, %c0_47, %c0_48], %74 {strides = array<i32>} : memref<4x4x128xf32, #tpu.memory_space<vmem>>, vector<1x1x128xf32>,
    %75 = arith.mulf %11, %47 : vector<20x128xf32>
    %cst_49 = arith.constant dense<0.000000e+00> : vector<128xf32>
    %76 = vector.multi_reduction <add>, %75, %cst_49 [0] : vector<20x128xf32> to vector<128xf32>
    %77 = vector.shape_cast %76 : vector<128xf32> to vector<1x128xf32>
    %c0_50 = arith.constant 0 : index
    %c3_51 = arith.constant 3 : index
    %c0_52 = arith.constant 0 : index
    %78 = vector.load %arg5[%c0_50, %c3_51, %c0_52] : memref<4x4x128xf32, #tpu.memory_space<vmem>>, vector<1x1x128xf32>
    %79 = vector.shape_cast %78 : vector<1x1x128xf32> to vector<1x128xf32>
    %80 = vector.shape_cast %77 : vector<1x128xf32> to vector<1x1x128xf32>
    tpu.vector_store %arg5[%c0_50, %c3_51, %c0_52], %80 {strides = array<i32>} : memref<4x4x128xf32, #tpu.memory_space<vmem>>, vector<1x1x128xf32>,
    %c3_53 = arith.constant 3 : index
    %c0_54 = arith.constant 0 : index
    %c0_55 = arith.constant 0 : index
    %81 = vector.load %arg5[%c3_53, %c0_54, %c0_55] : memref<4x4x128xf32, #tpu.memory_space<vmem>>, vector<1x1x128xf32>
    %82 = vector.shape_cast %81 : vector<1x1x128xf32> to vector<1x128xf32>
    %83 = vector.shape_cast %77 : vector<1x128xf32> to vector<1x1x128xf32>
    tpu.vector_store %arg5[%c3_53, %c0_54, %c0_55], %83 {strides = array<i32>} : memref<4x4x128xf32, #tpu.memory_space<vmem>>, vector<1x1x128xf32>,
    %84 = arith.mulf %23, %23 : vector<20x128xf32>
    %cst_56 = arith.constant dense<0.000000e+00> : vector<128xf32>
    %85 = vector.multi_reduction <add>, %84, %cst_56 [0] : vector<20x128xf32> to vector<128xf32>
    %86 = vector.shape_cast %85 : vector<128xf32> to vector<1x128xf32>
    %87 = arith.addf %86, %25 : vector<1x128xf32>
    %c1_57 = arith.constant 1 : index
    %c1_58 = arith.constant 1 : index
    %c0_59 = arith.constant 0 : index
    %88 = vector.load %arg5[%c1_57, %c1_58, %c0_59] : memref<4x4x128xf32, #tpu.memory_space<vmem>>, vector<1x1x128xf32>
    %89 = vector.shape_cast %88 : vector<1x1x128xf32> to vector<1x128xf32>
    %90 = vector.shape_cast %87 : vector<1x128xf32> to vector<1x1x128xf32>
    tpu.vector_store %arg5[%c1_57, %c1_58, %c0_59], %90 {strides = array<i32>} : memref<4x4x128xf32, #tpu.memory_space<vmem>>, vector<1x1x128xf32>,
    %91 = arith.mulf %23, %35 : vector<20x128xf32>
    %cst_60 = arith.constant dense<0.000000e+00> : vector<128xf32>
    %92 = vector.multi_reduction <add>, %91, %cst_60 [0] : vector<20x128xf32> to vector<128xf32>
    %93 = vector.shape_cast %92 : vector<128xf32> to vector<1x128xf32>
    %c1_61 = arith.constant 1 : index
    %c2_62 = arith.constant 2 : index
    %c0_63 = arith.constant 0 : index
    %94 = vector.load %arg5[%c1_61, %c2_62, %c0_63] : memref<4x4x128xf32, #tpu.memory_space<vmem>>, vector<1x1x128xf32>
    %95 = vector.shape_cast %94 : vector<1x1x128xf32> to vector<1x128xf32>
    %96 = vector.shape_cast %93 : vector<1x128xf32> to vector<1x1x128xf32>
    tpu.vector_store %arg5[%c1_61, %c2_62, %c0_63], %96 {strides = array<i32>} : memref<4x4x128xf32, #tpu.memory_space<vmem>>, vector<1x1x128xf32>,
    %c2_64 = arith.constant 2 : index
    %c1_65 = arith.constant 1 : index
    %c0_66 = arith.constant 0 : index
    %97 = vector.load %arg5[%c2_64, %c1_65, %c0_66] : memref<4x4x128xf32, #tpu.memory_space<vmem>>, vector<1x1x128xf32>
    %98 = vector.shape_cast %97 : vector<1x1x128xf32> to vector<1x128xf32>
    %99 = vector.shape_cast %93 : vector<1x128xf32> to vector<1x1x128xf32>
    tpu.vector_store %arg5[%c2_64, %c1_65, %c0_66], %99 {strides = array<i32>} : memref<4x4x128xf32, #tpu.memory_space<vmem>>, vector<1x1x128xf32>,
    %100 = arith.mulf %23, %47 : vector<20x128xf32>
    %cst_67 = arith.constant dense<0.000000e+00> : vector<128xf32>
    %101 = vector.multi_reduction <add>, %100, %cst_67 [0] : vector<20x128xf32> to vector<128xf32>
    %102 = vector.shape_cast %101 : vector<128xf32> to vector<1x128xf32>
    %c1_68 = arith.constant 1 : index
    %c3_69 = arith.constant 3 : index
    %c0_70 = arith.constant 0 : index
    %103 = vector.load %arg5[%c1_68, %c3_69, %c0_70] : memref<4x4x128xf32, #tpu.memory_space<vmem>>, vector<1x1x128xf32>
    %104 = vector.shape_cast %103 : vector<1x1x128xf32> to vector<1x128xf32>
    %105 = vector.shape_cast %102 : vector<1x128xf32> to vector<1x1x128xf32>
    tpu.vector_store %arg5[%c1_68, %c3_69, %c0_70], %105 {strides = array<i32>} : memref<4x4x128xf32, #tpu.memory_space<vmem>>, vector<1x1x128xf32>,
    %c3_71 = arith.constant 3 : index
    %c1_72 = arith.constant 1 : index
    %c0_73 = arith.constant 0 : index
    %106 = vector.load %arg5[%c3_71, %c1_72, %c0_73] : memref<4x4x128xf32, #tpu.memory_space<vmem>>, vector<1x1x128xf32>
    %107 = vector.shape_cast %106 : vector<1x1x128xf32> to vector<1x128xf32>
    %108 = vector.shape_cast %102 : vector<1x128xf32> to vector<1x1x128xf32>
    tpu.vector_store %arg5[%c3_71, %c1_72, %c0_73], %108 {strides = array<i32>} : memref<4x4x128xf32, #tpu.memory_space<vmem>>, vector<1x1x128xf32>,
    %109 = arith.mulf %35, %35 : vector<20x128xf32>
    %cst_74 = arith.constant dense<0.000000e+00> : vector<128xf32>
    %110 = vector.multi_reduction <add>, %109, %cst_74 [0] : vector<20x128xf32> to vector<128xf32>
    %111 = vector.shape_cast %110 : vector<128xf32> to vector<1x128xf32>
    %112 = arith.addf %111, %37 : vector<1x128xf32>
    %c2_75 = arith.constant 2 : index
    %c2_76 = arith.constant 2 : index
    %c0_77 = arith.constant 0 : index
    %113 = vector.load %arg5[%c2_75, %c2_76, %c0_77] : memref<4x4x128xf32, #tpu.memory_space<vmem>>, vector<1x1x128xf32>
    %114 = vector.shape_cast %113 : vector<1x1x128xf32> to vector<1x128xf32>
    %115 = vector.shape_cast %112 : vector<1x128xf32> to vector<1x1x128xf32>
    tpu.vector_store %arg5[%c2_75, %c2_76, %c0_77], %115 {strides = array<i32>} : memref<4x4x128xf32, #tpu.memory_space<vmem>>, vector<1x1x128xf32>,
    %116 = arith.mulf %35, %47 : vector<20x128xf32>
    %cst_78 = arith.constant dense<0.000000e+00> : vector<128xf32>
    %117 = vector.multi_reduction <add>, %116, %cst_78 [0] : vector<20x128xf32> to vector<128xf32>
    %118 = vector.shape_cast %117 : vector<128xf32> to vector<1x128xf32>
    %c2_79 = arith.constant 2 : index
    %c3_80 = arith.constant 3 : index
    %c0_81 = arith.constant 0 : index
    %119 = vector.load %arg5[%c2_79, %c3_80, %c0_81] : memref<4x4x128xf32, #tpu.memory_space<vmem>>, vector<1x1x128xf32>
    %120 = vector.shape_cast %119 : vector<1x1x128xf32> to vector<1x128xf32>
    %121 = vector.shape_cast %118 : vector<1x128xf32> to vector<1x1x128xf32>
    tpu.vector_store %arg5[%c2_79, %c3_80, %c0_81], %121 {strides = array<i32>} : memref<4x4x128xf32, #tpu.memory_space<vmem>>, vector<1x1x128xf32>,
    %c3_82 = arith.constant 3 : index
    %c2_83 = arith.constant 2 : index
    %c0_84 = arith.constant 0 : index
    %122 = vector.load %arg5[%c3_82, %c2_83, %c0_84] : memref<4x4x128xf32, #tpu.memory_space<vmem>>, vector<1x1x128xf32>
    %123 = vector.shape_cast %122 : vector<1x1x128xf32> to vector<1x128xf32>
    %124 = vector.shape_cast %118 : vector<1x128xf32> to vector<1x1x128xf32>
    tpu.vector_store %arg5[%c3_82, %c2_83, %c0_84], %124 {strides = array<i32>} : memref<4x4x128xf32, #tpu.memory_space<vmem>>, vector<1x1x128xf32>,
    %125 = arith.mulf %47, %47 : vector<20x128xf32>
    %cst_85 = arith.constant dense<0.000000e+00> : vector<128xf32>
    %126 = vector.multi_reduction <add>, %125, %cst_85 [0] : vector<20x128xf32> to vector<128xf32>
    %127 = vector.shape_cast %126 : vector<128xf32> to vector<1x128xf32>
    %128 = arith.addf %127, %49 : vector<1x128xf32>
    %c3_86 = arith.constant 3 : index
    %c3_87 = arith.constant 3 : index
    %c0_88 = arith.constant 0 : index
    %129 = vector.load %arg5[%c3_86, %c3_87, %c0_88] : memref<4x4x128xf32, #tpu.memory_space<vmem>>, vector<1x1x128xf32>
    %130 = vector.shape_cast %129 : vector<1x1x128xf32> to vector<1x128xf32>
    %131 = vector.shape_cast %128 : vector<1x128xf32> to vector<1x1x128xf32>
    tpu.vector_store %arg5[%c3_86, %c3_87, %c0_88], %131 {strides = array<i32>} : memref<4x4x128xf32, #tpu.memory_space<vmem>>, vector<1x1x128xf32>,
    return
  }
  func.func @transform_0(%arg0: i32) -> (i32, i32, i32) {
    %c0_i32 = arith.constant 0 : i32
    %c0_i32_0 = arith.constant 0 : i32
    %c0_i32_1 = arith.constant 0 : i32
    return %c0_i32, %c0_i32_0, %arg0 : i32, i32, i32
  }
  func.func @transform_1(%arg0: i32) -> (i32, i32) {
    %c0_i32 = arith.constant 0 : i32
    %c0_i32_0 = arith.constant 0 : i32
    %c0_i32_1 = arith.constant 0 : i32
    return %c0_i32, %c0_i32_0 : i32, i32
  }
  func.func @transform_2(%arg0: i32) -> (i32, i32) {
    %c0_i32 = arith.constant 0 : i32
    %c0_i32_0 = arith.constant 0 : i32
    %c0_i32_1 = arith.constant 0 : i32
    return %c0_i32, %c0_i32_0 : i32, i32
  }
  func.func @transform_3(%arg0: i32) -> (i32, i32) {
    %c0_i32 = arith.constant 0 : i32
    %c0_i32_0 = arith.constant 0 : i32
    return %c0_i32, %arg0 : i32, i32
  }
  func.func @transform_4(%arg0: i32) -> (i32, i32, i32) {
    %c0_i32 = arith.constant 0 : i32
    %c0_i32_0 = arith.constant 0 : i32
    %c0_i32_1 = arith.constant 0 : i32
    return %c0_i32, %c0_i32_0, %arg0 : i32, i32, i32
  }
  func.func @transform_5(%arg0: i32) -> (i32, i32) {
    %c0_i32 = arith.constant 0 : i32
    %c0_i32_0 = arith.constant 0 : i32
    return %c0_i32, %arg0 : i32, i32
  }
}

</mosaic_0001>

<llo_original>
// kernel: tpu_custom_call.1
$region0: #{tpu_custom_call.1}
  #allocation0 [shape = 'u32[]', space=smem, size = 0x4, offset = 0x4, fixed_abs, tag = 'smem constant byte address 0x4 - core index']
  #allocation1 [shape = 'u32[144,128]{1,0:T(1,128)}', space=vmem, size = 0x12000, scoped, tag = 'internal scratch']
  %s0 = inlined_call_operand.vmem [shape: f32[4,3,256], index: 0, kind: input, shape index: {}]
  %s1 = inlined_call_operand.vmem [shape: f32[23,3], index: 1, kind: input, shape index: {}]
  %s2 = inlined_call_operand.vmem [shape: f32[23,1], index: 2, kind: input, shape index: {}]
  %s3 = inlined_call_operand.hbm [shape: f32[4,256], index: 3, kind: output, shape index: {0}]
  %s4 = inlined_call_operand.hbm [shape: f32[4,4,256], index: 4, kind: output, shape index: {1}]
  %s5 = inlined_call_operand.hbm [shape: f32[4,256], index: 5, kind: output, shape index: {2}]
  %6 = xla_tuple %s3, %s4, %s5
  %s7 = sld [smem:[#allocation0]]
  $region102: #{tpu_custom_call.1} parent=0
    _
  %s9 = ssub.s32 1, %s7
  %s10 = scalar_select 0, %s9, %s7
  $region1: #{tpu_custom_call.1} parent=0
    #allocation2 [shape = 'u8[16384]{0}', space=vmem, size = 0x4000, scoped, tag = 'input window, operand 0']
    #allocation3 [shape = 'u8[4096]{0}', space=vmem, size = 0x1000, scoped, tag = 'output window, operand 0']
    #allocation4 [shape = 's32[2]{0}', space=sflag, size = 0x8, scoped, tag = 'scoped memory for tpu_custom_call.1']
    #allocation5 [shape = 'u8[16384]{0}', space=vmem, size = 0x4000, scoped, tag = 'output window, operand 1']
    #allocation6 [shape = 's32[2]{0}', space=sflag, size = 0x8, scoped, tag = 'scoped memory for tpu_custom_call.1']
    #allocation7 [shape = 'u8[4096]{0}', space=vmem, size = 0x1000, scoped, tag = 'output window, operand 2']
    %11 = vsyncpa [#allocation4], 0
    %s12 = scalar_lea.sflag [#allocation4], 1
    %13 = vsyncpa %s12, 0
    %14 = vsyncpa [#allocation6], 0
    %s15 = scalar_lea.sflag [#allocation6], 1
    %16 = vsyncpa %s15, 0
    loop: start=0, step=1, limit=4
    $region2: #{tpu_custom_call.1} parent=1 // loop_pre_header
      _
    $region3: #{tpu_custom_call.1} parent=1 // loop_header
      %s18 = sphi 0, %s22
      %p19 = scmp.ge.s32.totalorder %s18, 4
      %s28 = sphi 0, %s30
      %s31 = sphi 0, %s28
      %s32 = sphi 0, %s31
      %s48 = sphi 0, %s32
      %s52 = sphi 0, %s52
      %s54 = sphi 0, %s52
      %s55 = sphi 0, %s54
      %s69 = sphi 0, %s55
      %s73 = sphi 0, %s73
      %s75 = sphi 0, %s73
      %s76 = sphi 0, %s75
      %s90 = sphi 0, %s76
      %s96 = sphi 0, %s98
      %s99 = sphi 0, %s96
      %s100 = sphi 0, %s99
      %s116 = sphi 0, %s100
      %s122 = sphi 0, %s124
      %s125 = sphi 0, %s122
      %s126 = sphi 0, %s125
      %s142 = sphi 0, %s126
      %s148 = sphi 0, %s150
      %s151 = sphi 0, %s148
      %s152 = sphi 0, %s151
      %s168 = sphi 0, %s152
    $region4: #{tpu_custom_call.1} parent=1 // loop_header_branch
      %21 = sbr.rel (%p19) target = $region8
    $region5: #{tpu_custom_call.1} parent=1 // loop_body
      %s23 = ssub.s32 %s18, 1
      %s24 = ssub.s32 %s18, 2
      %s25 = sadd.s32 %s18, 1
      %s26 = ssub.s32 %s18, %s25
      %p27 = scmp.eq.s32.totalorder %s26, 0
      %s29 = sadd.s32 %s28, 1
      %s30 = scalar_select %p27, %s28, %s29
      %p33 = pneg %p27
      %p34 = scmp.eq.s32.totalorder %s18, 1
      %p35 = por %p33, %p34
      %p36 = scmp.ne.s32.totalorder %s28, %s31
      %p37 = scmp.eq.s32.totalorder %s18, 0
      %p38 = por %p36, %p37
      %p39 = scmp.ne.s32.totalorder %s28, %s31
      %p40 = scmp.eq.s32.totalorder %s23, 1
      %p41 = por %p39, %p40
      %p42 = scmp.ne.s32.totalorder %s31, %s32
      %p43 = scmp.eq.s32.totalorder %s23, 0
      %p44 = por %p42, %p43
      %p45 = scmp.ne.s32.totalorder %s31, %s32
      %p46 = scmp.eq.s32.totalorder %s24, 1
      %p47 = por %p45, %p46
      %p49 = scmp.ne.s32.totalorder %s32, %s48
      %p50 = scmp.eq.s32.totalorder %s24, 0
      %p51 = por %p49, %p50
      %s53 = sadd.s32 %s52, 1
      %p56 = scmp.eq.s32.totalorder %s18, 1
      %p57 = scmp.ne.s32.totalorder %s52, %s54
      %p58 = scmp.eq.s32.totalorder %s18, 0
      %p59 = por %p57, %p58
      %p60 = scmp.ne.s32.totalorder %s52, %s54
      %p61 = scmp.eq.s32.totalorder %s23, 1
      %p62 = por %p60, %p61
      %p63 = scmp.ne.s32.totalorder %s54, %s55
      %p64 = scmp.eq.s32.totalorder %s23, 0
      %p65 = por %p63, %p64
      %p66 = scmp.ne.s32.totalorder %s54, %s55
      %p67 = scmp.eq.s32.totalorder %s24, 1
      %p68 = por %p66, %p67
      %p70 = scmp.ne.s32.totalorder %s55, %s69
      %p71 = scmp.eq.s32.totalorder %s24, 0
      %p72 = por %p70, %p71
      %s74 = sadd.s32 %s73, 1
      %p77 = scmp.eq.s32.totalorder %s18, 1
      %p78 = scmp.ne.s32.totalorder %s73, %s75
      %p79 = scmp.eq.s32.totalorder %s18, 0
      %p80 = por %p78, %p79
      %p81 = scmp.ne.s32.totalorder %s73, %s75
      %p82 = scmp.eq.s32.totalorder %s23, 1
      %p83 = por %p81, %p82
      %p84 = scmp.ne.s32.totalorder %s75, %s76
      %p85 = scmp.eq.s32.totalorder %s23, 0
      %p86 = por %p84, %p85
      %p87 = scmp.ne.s32.totalorder %s75, %s76
      %p88 = scmp.eq.s32.totalorder %s24, 1
      %p89 = por %p87, %p88
      %p91 = scmp.ne.s32.totalorder %s76, %s90
      %p92 = scmp.eq.s32.totalorder %s24, 0
      %p93 = por %p91, %p92
      %s94 = ssub.s32 %s18, %s25
      %p95 = scmp.eq.s32.totalorder %s94, 0
      %s97 = sadd.s32 %s96, 1
      %s98 = scalar_select %p95, %s96, %s97
      %p101 = pneg %p95
      %p102 = scmp.eq.s32.totalorder %s18, 1
      %p103 = por %p101, %p102
      %p104 = scmp.ne.s32.totalorder %s96, %s99
      %p105 = scmp.eq.s32.totalorder %s18, 0
      %p106 = por %p104, %p105
      %p107 = scmp.ne.s32.totalorder %s96, %s99
      %p108 = scmp.eq.s32.totalorder %s23, 1
      %p109 = por %p107, %p108
      %p110 = scmp.ne.s32.totalorder %s99, %s100
      %p111 = scmp.eq.s32.totalorder %s23, 0
      %p112 = por %p110, %p111
      %p113 = scmp.ne.s32.totalorder %s99, %s100
      %p114 = scmp.eq.s32.totalorder %s24, 1
      %p115 = por %p113, %p114
      %p117 = scmp.ne.s32.totalorder %s100, %s116
      %p118 = scmp.eq.s32.totalorder %s24, 0
      %p119 = por %p117, %p118
      %s120 = ssub.s32 %s18, %s25
      %p121 = scmp.eq.s32.totalorder %s120, 0
      %s123 = sadd.s32 %s122, 1
      %s124 = scalar_select %p121, %s122, %s123
      %p127 = pneg %p121
      %p128 = scmp.eq.s32.totalorder %s18, 1
      %p129 = por %p127, %p128
      %p130 = scmp.ne.s32.totalorder %s122, %s125
      %p131 = scmp.eq.s32.totalorder %s18, 0
      %p132 = por %p130, %p131
      %p133 = scmp.ne.s32.totalorder %s122, %s125
      %p134 = scmp.eq.s32.totalorder %s23, 1
      %p135 = por %p133, %p134
      %p136 = scmp.ne.s32.totalorder %s125, %s126
      %p137 = scmp.eq.s32.totalorder %s23, 0
      %p138 = por %p136, %p137
      %p139 = scmp.ne.s32.totalorder %s125, %s126
      %p140 = scmp.eq.s32.totalorder %s24, 1
      %p141 = por %p139, %p140
      %p143 = scmp.ne.s32.totalorder %s126, %s142
      %p144 = scmp.eq.s32.totalorder %s24, 0
      %p145 = por %p143, %p144
      %s146 = ssub.s32 %s18, %s25
      %p147 = scmp.eq.s32.totalorder %s146, 0
      %s149 = sadd.s32 %s148, 1
      %s150 = scalar_select %p147, %s148, %s149
      %p153 = pneg %p147
      %p154 = scmp.eq.s32.totalorder %s18, 1
      %p155 = por %p153, %p154
      %p156 = scmp.ne.s32.totalorder %s148, %s151
      %p157 = scmp.eq.s32.totalorder %s18, 0
      %p158 = por %p156, %p157
      %p159 = scmp.ne.s32.totalorder %s148, %s151
      %p160 = scmp.eq.s32.totalorder %s23, 1
      %p161 = por %p159, %p160
      %p162 = scmp.ne.s32.totalorder %s151, %s152
      %p163 = scmp.eq.s32.totalorder %s23, 0
      %p164 = por %p162, %p163
      %p165 = scmp.ne.s32.totalorder %s151, %s152
      %p166 = scmp.eq.s32.totalorder %s24, 1
      %p167 = por %p165, %p166
      %p169 = scmp.ne.s32.totalorder %s152, %s168
      %p170 = scmp.eq.s32.totalorder %s24, 0
      %p171 = por %p169, %p170
      %p172 = scmp.le.s32.totalorder 1, %s18
      %p173 = scmp.lt.s32.totalorder %s18, 3
      %p174 = pnand %p172, %p173
      %p175 = pneg %p174
      // Predicated region
      $region9: #{tpu_custom_call.1} parent=5 // pred_check
        _
      $region10: #{tpu_custom_call.1} parent=5 // pred_check_branch
        %177 = sbr.rel (%p174) target = $region12
      $region11: #{tpu_custom_call.1} parent=5 // pred_region
        %s178 = ssub.s32 %s18, 1
        // Predicated region
        $region13: #{tpu_custom_call.1} parent=11 // pred_check
          %p179 = pneg %p65
        $region14: #{tpu_custom_call.1} parent=11 // pred_check_branch
          %181 = sbr.rel (%p179) target = $region16
        $region15: #{tpu_custom_call.1} parent=11 // pred_region
          _
        $region16: #{tpu_custom_call.1} parent=11 // pred_fallthru
          _
        // Predicated region
        $region17: #{tpu_custom_call.1} parent=11 // pred_check
          %p182 = pneg %p86
        $region18: #{tpu_custom_call.1} parent=11 // pred_check_branch
          %184 = sbr.rel (%p182) target = $region20
        $region19: #{tpu_custom_call.1} parent=11 // pred_region
          _
        $region20: #{tpu_custom_call.1} parent=11 // pred_fallthru
          _
      $region12: #{tpu_custom_call.1} parent=5 // pred_fallthru
        _
      %p185 = scmp.lt.s32.totalorder %s18, 2
      // Predicated region
      $region21: #{tpu_custom_call.1} parent=5 // pred_check
        %p186 = pneg %p185
      $region22: #{tpu_custom_call.1} parent=5 // pred_check_branch
        %188 = sbr.rel (%p186) target = $region24
      $region23: #{tpu_custom_call.1} parent=5 // pred_region
        // Predicated region
        $region25: #{tpu_custom_call.1} parent=23 // pred_check
          %p189 = pneg %p38
        $region26: #{tpu_custom_call.1} parent=23 // pred_check_branch
          %191 = sbr.rel (%p189) target = $region28
        $region27: #{tpu_custom_call.1} parent=23 // pred_region
          %s192 = sand.u32 %s28, 1
          %s193 = sand.u32 %s28, 1
          %s194 = smul.addr %s193, 16
          %s195 = scalar_lea.vmem [#allocation2], %s194
          %s196 = smul.addr %s18, 4
          %s197 = scalar_lea.vmem %s0, %s196
          // Predicated region
          $region29: #{tpu_custom_call.1} parent=27 // pred_check
            _
          $region30: #{tpu_custom_call.1} parent=27 // pred_check_branch
            %199 = sbr.rel (0) target = $region32
          $region31: #{tpu_custom_call.1} parent=27 // pred_region
            // Predicated region
            $region33: #{tpu_custom_call.1} parent=31 // pred_check
              _
            $region34: #{tpu_custom_call.1} parent=31 // pred_check_branch
              %201 = sbr.rel target = $region36
            $region35: #{tpu_custom_call.1} parent=31 // pred_region
              // Predicated region
              $region48: #{tpu_custom_call.1} parent=35 // pred_check
                _
              $region49: #{tpu_custom_call.1} parent=35 // pred_check_branch
                %222 = sbr.rel (0) target = $region51
              $region50: #{tpu_custom_call.1} parent=35 // pred_region
                loop: start=0, step=1, limit=1
                $region52: #{tpu_custom_call.1} parent=50 // loop_pre_header
                  _
                $region53: #{tpu_custom_call.1} parent=50 // loop_header
                  %s224 = sphi 0, %s228
                  %p225 = scmp.ge.s32.totalorder %s224, 1
                  %s229 = sphi %s197, %s197
                  %s230 = sphi %s195, %s195
                $region54: #{tpu_custom_call.1} parent=50 // loop_header_branch
                  %227 = sbr.rel (%p225) target = $region58
                $region55: #{tpu_custom_call.1} parent=50 // loop_body
                  _
                $region56: #{tpu_custom_call.1} parent=50 // loop_footer
                  %s228 = sadd.s32 1, %s224
                $region57: #{tpu_custom_call.1} parent=50 // loop_footer_branch
                  %223 = sbr.rel target = $region53
                $region58: #{tpu_custom_call.1} parent=50 // loop_exit
                  _
                loop: start=0, step=1, limit=1
                $region59: #{tpu_custom_call.1} parent=50 // loop_pre_header
                  _
                $region60: #{tpu_custom_call.1} parent=50 // loop_header
                  %s233 = sphi 0, %s237
                  %p234 = scmp.ge.s32.totalorder %s233, 1
                  %s238 = sphi %s197, %s197
                  %s239 = sphi %s195, %s195
                $region61: #{tpu_custom_call.1} parent=50 // loop_header_branch
                  %236 = sbr.rel (%p234) target = $region65
                $region62: #{tpu_custom_call.1} parent=50 // loop_body
                  %v240 = vld [vmem:[%s238] sm:$0xf]
                  %241 = vst [vmem:[%s239] sm:$0xf] %v240
                  %v242 = vld [vmem:[%s238 + $0x8] sm:$0xf]
                  %243 = vst [vmem:[%s239 + $0x4] sm:$0xf] %v242
                  %v244 = vld [vmem:[%s238 + $0x10] sm:$0xf]
                  %245 = vst [vmem:[%s239 + $0x8] sm:$0xf] %v244
                  %v246 = vld [vmem:[%s238 + $0x18] sm:$0xf]
                  %247 = vst [vmem:[%s239 + $0xc] sm:$0xf] %v246
                $region63: #{tpu_custom_call.1} parent=50 // loop_footer
                  %s237 = sadd.s32 1, %s233
                $region64: #{tpu_custom_call.1} parent=50 // loop_footer_branch
                  %232 = sbr.rel target = $region60
                $region65: #{tpu_custom_call.1} parent=50 // loop_exit
                  _
              $region51: #{tpu_custom_call.1} parent=35 // pred_fallthru
                _
            $region36: #{tpu_custom_call.1} parent=31 // pred_fallthru
              _
            // Predicated region
            $region37: #{tpu_custom_call.1} parent=31 // pred_check
              _
            $region38: #{tpu_custom_call.1} parent=31 // pred_check_branch
              %203 = sbr.rel (0) target = $region40
            $region39: #{tpu_custom_call.1} parent=31 // pred_region
              loop: start=0, step=1, limit=1
              $region41: #{tpu_custom_call.1} parent=39 // loop_pre_header
                _
              $region42: #{tpu_custom_call.1} parent=39 // loop_header
                %s206 = sphi 0, %s210
                %p207 = scmp.ge.s32.totalorder %s206, 1
                %s211 = sphi %s197, %s197
                %s212 = sphi %s195, %s195
              $region43: #{tpu_custom_call.1} parent=39 // loop_header_branch
                %209 = sbr.rel (%p207) target = $region47
              $region44: #{tpu_custom_call.1} parent=39 // loop_body
                %v213 = vld [vmem:[%s211] sm:$0xf]
                %214 = vst [vmem:[%s212] sm:$0xf] %v213
                %v215 = vld [vmem:[%s211 + $0x8] sm:$0xf]
                %216 = vst [vmem:[%s212 + $0x4] sm:$0xf] %v215
                %v217 = vld [vmem:[%s211 + $0x10] sm:$0xf]
                %218 = vst [vmem:[%s212 + $0x8] sm:$0xf] %v217
                %v219 = vld [vmem:[%s211 + $0x18] sm:$0xf]
                %220 = vst [vmem:[%s212 + $0xc] sm:$0xf] %v219
              $region45: #{tpu_custom_call.1} parent=39 // loop_footer
                %s210 = sadd.s32 1, %s206
              $region46: #{tpu_custom_call.1} parent=39 // loop_footer_branch
                %205 = sbr.rel target = $region42
              $region47: #{tpu_custom_call.1} parent=39 // loop_exit
                _
            $region40: #{tpu_custom_call.1} parent=31 // pred_fallthru
              _
          $region32: #{tpu_custom_call.1} parent=27 // pred_fallthru
            _
          %248 = vnop
        $region28: #{tpu_custom_call.1} parent=23 // pred_fallthru
          _
      $region24: #{tpu_custom_call.1} parent=5 // pred_fallthru
        _
      %p249 = scmp.le.s32.totalorder 1, %s18
      %p250 = scmp.lt.s32.totalorder %s18, 3
      %p251 = pnand %p249, %p250
      %p252 = pneg %p251
      // Predicated region
      $region66: #{tpu_custom_call.1} parent=5 // pred_check
        _
      $region67: #{tpu_custom_call.1} parent=5 // pred_check_branch
        %254 = sbr.rel (%p251) target = $region69
      $region68: #{tpu_custom_call.1} parent=5 // pred_region
        %s255 = ssub.s32 %s18, 1
        %s256 = sand.u32 %s31, 1
        %s257 = sand.u32 %s31, 1
        %s258 = smul.addr %s257, 16
        %s259 = scalar_lea.vmem [#allocation2], %s258
        // Predicated region
        $region70: #{tpu_custom_call.1} parent=68 // pred_check
          %p260 = pneg %p44
        $region71: #{tpu_custom_call.1} parent=68 // pred_check_branch
          %262 = sbr.rel (%p260) target = $region73
        $region72: #{tpu_custom_call.1} parent=68 // pred_region
          _
        $region73: #{tpu_custom_call.1} parent=68 // pred_fallthru
          _
        %s263 = sand.u32 %s31, 1
        %s264 = sand.u32 %s31, 1
        %s265 = smul.addr %s264, 16
        %s266 = scalar_lea.vmem [#allocation2], %s265
        %p267 = pneg %p44
        %p268 = pneg %p41
        %p269 = pneg %p65
        %p270 = pneg %p62
        %p271 = pneg %p86
        %p272 = pneg %p83
        %p273 = pneg %p112
        %p274 = pneg %p109
        %s275 = sand.u32 %s99, 1
        %s276 = scalar_lea.sflag [#allocation4], %s275
        %s277 = sand.u32 %s99, 1
        %s278 = smul.addr %s277, 4
        %s279 = scalar_lea.vmem [#allocation3], %s278
        %p280 = pneg %p138
        %p281 = pneg %p135
        %s282 = sand.u32 %s23, 1
        %s283 = scalar_lea.sflag [#allocation6], %s282
        %s284 = sand.u32 %s125, 1
        %s285 = smul.addr %s284, 16
        %s286 = scalar_lea.vmem [#allocation5], %s285
        %p287 = pneg %p164
        %p288 = pneg %p161
        %s289 = sand.u32 %s23, 1
        %s290 = scalar_lea.sflag [#allocation6], %s289
        %s291 = sand.u32 %s151, 1
        %s292 = smul.addr %s291, 4
        %s293 = scalar_lea.vmem [#allocation7], %s292
        %v294 = vld [vmem:[%s1] sm:$0xff]
        %v295 = vld [vmem:[%s1 + $0x8] sm:$0xff]
        %v296 = vld [vmem:[%s1 + $0x10] sm:$0x7f]
        %v297 = vld [vmem:[%s2] sm:$0xff]
        %v298 = vld [vmem:[%s2 + $0x8] sm:$0xff]
        %v299 = vld [vmem:[%s2 + $0x10] sm:$0x7f]
        %v300 = vld [vmem:[%s259] sm:$0x7]
        %302 = vset.pattern.permute.xlu0 0
        %303 = vperm.xlu0 %302, %v297
        %v304 = vpop.permute.xlu0 %303
        %307 = vset.pattern.permute.xlu0 0
        %308 = vperm.xlu0 %307, %v298
        %v309 = vpop.permute.xlu0 %308
        %312 = vset.pattern.permute.xlu0 0
        %313 = vperm.xlu0 %312, %v299
        %v314 = vpop.permute.xlu0 %313
        %vm316 = vcmask 23552
        %v318 = vsel %vm316, %v294, 0
        %v321 = vsel %vm316, %v295, 0
        %v324 = vsel %vm316, %v296, 0
        %vm326 = vcmask 1042432
        %v328 = vsel %vm326, %v300, 0
        %330 = vmatprep.subr.mxu0 0.0
        %331 = vmatpush1.msra.mxu0 %v328
        %332 = vmatprep.subr.mxu0 0.0
        %333 = vmatpush1.msra.mxu0 0.0
        %334 = vmatprep.subr.mxu0 0.0
        %335 = vmatpush1.msra.mxu0 0.0
        %336 = vmatprep.subr.mxu0 0.0
        %337 = vmatpush1.msra.mxu0 0.0
        %338 = vmatprep.subr.mxu0 0.0
        %339 = vmatpush1.msra.mxu0 0.0
        %340 = vmatprep.subr.mxu0 0.0
        %341 = vmatpush1.msra.mxu0 0.0
        %342 = vmatprep.subr.mxu0 0.0
        %343 = vmatpush1.msra.mxu0 0.0
        %344 = vmatprep.subr.mxu0 0.0
        %345 = vmatpush1.msra.mxu0 0.0
        %346 = vmatprep.subr.mxu0 0.0
        %347 = vmatpush1.msra.mxu0 0.0
        %348 = vmatprep.subr.mxu0 0.0
        %349 = vmatpush1.msra.mxu0 0.0
        %350 = vmatprep.subr.mxu0 0.0
        %351 = vmatpush1.msra.mxu0 0.0
        %352 = vmatprep.subr.mxu0 0.0
        %353 = vmatpush1.msra.mxu0 0.0
        %354 = vmatprep.subr.mxu0 0.0
        %355 = vmatpush1.msra.mxu0 0.0
        %356 = vmatprep.subr.mxu0 0.0
        %357 = vmatpush1.msra.mxu0 0.0
        %358 = vmatprep.subr.mxu0 0.0
        %359 = vmatpush1.msra.mxu0 0.0
        %360 = vmatprep.subr.mxu0 0.0
        %361 = vmatpush1.msra.mxu0 0.0
        %362 = vmatprep.subr.mxu0 0.0
        %363 = vmatpush1.msra.mxu0 0.0
        %364 = vmatprep.subr.mxu0 0.0
        %365 = vmatpush1.msra.mxu0 0.0
        %366 = vmatprep.subr.mxu0 0.0
        %367 = vmatpush1.msra.mxu0 0.0
        %368 = vmatprep.subr.mxu0 0.0
        %369 = vmatpush1.msra.mxu0 0.0
        %370 = vmatprep.subr.mxu0 0.0
        %371 = vmatpush1.msra.mxu0 0.0
        %372 = vmatprep.subr.mxu0 0.0
        %373 = vmatpush1.msra.mxu0 0.0
        %374 = vmatprep.subr.mxu0 0.0
        %375 = vmatpush1.msra.mxu0 0.0
        %376 = vmatprep.subr.mxu0 0.0
        %377 = vmatpush1.msra.mxu0 0.0
        %378 = vmatprep.subr.mxu0 0.0
        %379 = vmatpush1.msra.mxu0 0.0
        %380 = vmatprep.subr.mxu0 0.0
        %381 = vmatpush1.msra.mxu0 0.0
        %382 = vmatprep.subr.mxu0 0.0
        %383 = vmatpush1.msra.mxu0 0.0
        %384 = vmatprep.subr.mxu0 0.0
        %385 = vmatpush1.msra.mxu0 0.0
        %386 = vmatprep.subr.mxu0 0.0
        %387 = vmatpush1.msra.mxu0 0.0
        %388 = vmatprep.subr.mxu0 0.0
        %389 = vmatpush1.msra.mxu0 0.0
        %390 = vmatprep.subr.mxu0 0.0
        %391 = vmatpush1.msra.mxu0 0.0
        %392 = vmatprep.subr.mxu0 0.0
        %393 = vmatpush1.msra.mxu0 0.0
        %394 = vmatprep.mubr.f32.mxu0 0.0
        %395 = vmatmul.mubr.f32.gmra.mrb[0].mxu0 %v318
        %v396 = vpop.f32.mrb[0].mxu0
        %v397 = vadd.f32 %v304, %v396
        %v398 = vpop.f32.mrb[0].mxu0
        %399 = vmatprep.mubr.f32.mxu0 0.0
        %400 = vmatmul.mubr.f32.gmra.mrb[0].mxu0 %v321
        %v401 = vpop.f32.mrb[0].mxu0
        %v402 = vadd.f32 %v309, %v401
        %v403 = vpop.f32.mrb[0].mxu0
        %404 = vmatprep.mubr.f32.mxu0 0.0
        %405 = vmatmul.mubr.f32.gmra.mrb[0].mxu0 %v324
        %v406 = vpop.f32.mrb[0].mxu0
        %v407 = vadd.f32 %v314, %v406
        %v408 = vpop.f32.mrb[0].mxu0
        %409 = vdwg.mxu0
        %410 = vst [vmem:[%s279] sm:$0x1] %v397
        %411 = vst [vmem:[%s293 - $0x6] sm:$0x40] %v407
        %v412 = vmul.f32 %v407, 1.442695
        %v413 = vpow.pop %v412
        %s414 = scalar_lea.vmem %s259, 4 [#allocation2]
        %v415 = vld [vmem:[%s414] sm:$0x7]
        %v417 = vsel %vm326, %v415, 0
        %419 = vmatprep.subr.mxu0 0.0
        %420 = vmatpush1.msra.mxu0 %v417
        %421 = vmatprep.subr.mxu0 0.0
        %422 = vmatpush1.msra.mxu0 0.0
        %423 = vmatprep.subr.mxu0 0.0
        %424 = vmatpush1.msra.mxu0 0.0
        %425 = vmatprep.subr.mxu0 0.0
        %426 = vmatpush1.msra.mxu0 0.0
        %427 = vmatprep.subr.mxu0 0.0
        %428 = vmatpush1.msra.mxu0 0.0
        %429 = vmatprep.subr.mxu0 0.0
        %430 = vmatpush1.msra.mxu0 0.0
        %431 = vmatprep.subr.mxu0 0.0
        %432 = vmatpush1.msra.mxu0 0.0
        %433 = vmatprep.subr.mxu0 0.0
        %434 = vmatpush1.msra.mxu0 0.0
        %435 = vmatprep.subr.mxu0 0.0
        %436 = vmatpush1.msra.mxu0 0.0
        %437 = vmatprep.subr.mxu0 0.0
        %438 = vmatpush1.msra.mxu0 0.0
        %439 = vmatprep.subr.mxu0 0.0
        %440 = vmatpush1.msra.mxu0 0.0
        %441 = vmatprep.subr.mxu0 0.0
        %442 = vmatpush1.msra.mxu0 0.0
        %443 = vmatprep.subr.mxu0 0.0
        %444 = vmatpush1.msra.mxu0 0.0
        %445 = vmatprep.subr.mxu0 0.0
        %446 = vmatpush1.msra.mxu0 0.0
        %447 = vmatprep.subr.mxu0 0.0
        %448 = vmatpush1.msra.mxu0 0.0
        %449 = vmatprep.subr.mxu0 0.0
        %450 = vmatpush1.msra.mxu0 0.0
        %451 = vmatprep.subr.mxu0 0.0
        %452 = vmatpush1.msra.mxu0 0.0
        %453 = vmatprep.subr.mxu0 0.0
        %454 = vmatpush1.msra.mxu0 0.0
        %455 = vmatprep.subr.mxu0 0.0
        %456 = vmatpush1.msra.mxu0 0.0
        %457 = vmatprep.subr.mxu0 0.0
        %458 = vmatpush1.msra.mxu0 0.0
        %459 = vmatprep.subr.mxu0 0.0
        %460 = vmatpush1.msra.mxu0 0.0
        %461 = vmatprep.subr.mxu0 0.0
        %462 = vmatpush1.msra.mxu0 0.0
        %463 = vmatprep.subr.mxu0 0.0
        %464 = vmatpush1.msra.mxu0 0.0
        %465 = vmatprep.subr.mxu0 0.0
        %466 = vmatpush1.msra.mxu0 0.0
        %467 = vmatprep.subr.mxu0 0.0
        %468 = vmatpush1.msra.mxu0 0.0
        %469 = vmatprep.subr.mxu0 0.0
        %470 = vmatpush1.msra.mxu0 0.0
        %471 = vmatprep.subr.mxu0 0.0
        %472 = vmatpush1.msra.mxu0 0.0
        %473 = vmatprep.subr.mxu0 0.0
        %474 = vmatpush1.msra.mxu0 0.0
        %475 = vmatprep.subr.mxu0 0.0
        %476 = vmatpush1.msra.mxu0 0.0
        %477 = vmatprep.subr.mxu0 0.0
        %478 = vmatpush1.msra.mxu0 0.0
        %479 = vmatprep.subr.mxu0 0.0
        %480 = vmatpush1.msra.mxu0 0.0
        %481 = vmatprep.subr.mxu0 0.0
        %482 = vmatpush1.msra.mxu0 0.0
        %483 = vmatprep.mubr.f32.mxu0 0.0
        %484 = vmatmul.mubr.f32.gmra.mrb[0].mxu0 %v318
        %v485 = vpop.f32.mrb[0].mxu0
        %v486 = vadd.f32 %v304, %v485
        %v487 = vpop.f32.mrb[0].mxu0
        %488 = vmatprep.mubr.f32.mxu0 0.0
        %489 = vmatmul.mubr.f32.gmra.mrb[0].mxu0 %v321
        %v490 = vpop.f32.mrb[0].mxu0
        %v491 = vadd.f32 %v309, %v490
        %v492 = vpop.f32.mrb[0].mxu0
        %493 = vmatprep.mubr.f32.mxu0 0.0
        %494 = vmatmul.mubr.f32.gmra.mrb[0].mxu0 %v324
        %v495 = vpop.f32.mrb[0].mxu0
        %v496 = vadd.f32 %v314, %v495
        %v497 = vpop.f32.mrb[0].mxu0
        %498 = vdwg.mxu0
        %499 = vst [vmem:[%s279 + $0x1] sm:$0x1] %v486
        %500 = vst [vmem:[%s293 - $0x5] sm:$0x40] %v496
        %v501 = vmul.f32 %v496, 1.442695
        %v502 = vpow.pop %v501
        %s503 = scalar_lea.vmem %s259, 8 [#allocation2]
        %v504 = vld [vmem:[%s503] sm:$0x7]
        %v506 = vsel %vm326, %v504, 0
        %508 = vmatprep.subr.mxu0 0.0
        %509 = vmatpush1.msra.mxu0 %v506
        %510 = vmatprep.subr.mxu0 0.0
        %511 = vmatpush1.msra.mxu0 0.0
        %512 = vmatprep.subr.mxu0 0.0
        %513 = vmatpush1.msra.mxu0 0.0
        %514 = vmatprep.subr.mxu0 0.0
        %515 = vmatpush1.msra.mxu0 0.0
        %516 = vmatprep.subr.mxu0 0.0
        %517 = vmatpush1.msra.mxu0 0.0
        %518 = vmatprep.subr.mxu0 0.0
        %519 = vmatpush1.msra.mxu0 0.0
        %520 = vmatprep.subr.mxu0 0.0
        %521 = vmatpush1.msra.mxu0 0.0
        %522 = vmatprep.subr.mxu0 0.0
        %523 = vmatpush1.msra.mxu0 0.0
        %524 = vmatprep.subr.mxu0 0.0
        %525 = vmatpush1.msra.mxu0 0.0
        %526 = vmatprep.subr.mxu0 0.0
        %527 = vmatpush1.msra.mxu0 0.0
        %528 = vmatprep.subr.mxu0 0.0
        %529 = vmatpush1.msra.mxu0 0.0
        %530 = vmatprep.subr.mxu0 0.0
        %531 = vmatpush1.msra.mxu0 0.0
        %532 = vmatprep.subr.mxu0 0.0
        %533 = vmatpush1.msra.mxu0 0.0
        %534 = vmatprep.subr.mxu0 0.0
        %535 = vmatpush1.msra.mxu0 0.0
        %536 = vmatprep.subr.mxu0 0.0
        %537 = vmatpush1.msra.mxu0 0.0
        %538 = vmatprep.subr.mxu0 0.0
        %539 = vmatpush1.msra.mxu0 0.0
        %540 = vmatprep.subr.mxu0 0.0
        %541 = vmatpush1.msra.mxu0 0.0
        %542 = vmatprep.subr.mxu0 0.0
        %543 = vmatpush1.msra.mxu0 0.0
        %544 = vmatprep.subr.mxu0 0.0
        %545 = vmatpush1.msra.mxu0 0.0
        %546 = vmatprep.subr.mxu0 0.0
        %547 = vmatpush1.msra.mxu0 0.0
        %548 = vmatprep.subr.mxu0 0.0
        %549 = vmatpush1.msra.mxu0 0.0
        %550 = vmatprep.subr.mxu0 0.0
        %551 = vmatpush1.msra.mxu0 0.0
        %552 = vmatprep.subr.mxu0 0.0
        %553 = vmatpush1.msra.mxu0 0.0
        %554 = vmatprep.subr.mxu0 0.0
        %555 = vmatpush1.msra.mxu0 0.0
        %556 = vmatprep.subr.mxu0 0.0
        %557 = vmatpush1.msra.mxu0 0.0
        %558 = vmatprep.subr.mxu0 0.0
        %559 = vmatpush1.msra.mxu0 0.0
        %560 = vmatprep.subr.mxu0 0.0
        %561 = vmatpush1.msra.mxu0 0.0
        %562 = vmatprep.subr.mxu0 0.0
        %563 = vmatpush1.msra.mxu0 0.0
        %564 = vmatprep.subr.mxu0 0.0
        %565 = vmatpush1.msra.mxu0 0.0
        %566 = vmatprep.subr.mxu0 0.0
        %567 = vmatpush1.msra.mxu0 0.0
        %568 = vmatprep.subr.mxu0 0.0
        %569 = vmatpush1.msra.mxu0 0.0
        %570 = vmatprep.subr.mxu0 0.0
        %571 = vmatpush1.msra.mxu0 0.0
        %572 = vmatprep.mubr.f32.mxu0 0.0
        %573 = vmatmul.mubr.f32.gmra.mrb[0].mxu0 %v318
        %v574 = vpop.f32.mrb[0].mxu0
        %v575 = vadd.f32 %v304, %v574
        %v576 = vpop.f32.mrb[0].mxu0
        %577 = vmatprep.mubr.f32.mxu0 0.0
        %578 = vmatmul.mubr.f32.gmra.mrb[0].mxu0 %v321
        %v579 = vpop.f32.mrb[0].mxu0
        %v580 = vadd.f32 %v309, %v579
        %v581 = vpop.f32.mrb[0].mxu0
        %582 = vmatprep.mubr.f32.mxu0 0.0
        %583 = vmatmul.mubr.f32.gmra.mrb[0].mxu0 %v324
        %v584 = vpop.f32.mrb[0].mxu0
        %v585 = vadd.f32 %v314, %v584
        %v586 = vpop.f32.mrb[0].mxu0
        %587 = vdwg.mxu0
        %588 = vst [vmem:[%s279 + $0x2] sm:$0x1] %v575
        %589 = vst [vmem:[%s293 - $0x4] sm:$0x40] %v585
        %v590 = vmul.f32 %v585, 1.442695
        %v591 = vpow.pop %v590
        %s592 = scalar_lea.vmem %s259, 12 [#allocation2]
        %v593 = vld [vmem:[%s592] sm:$0x7]
        %v595 = vsel %vm326, %v593, 0
        %597 = vmatprep.subr.mxu0 0.0
        %598 = vmatpush1.msra.mxu0 %v595
        %599 = vmatprep.subr.mxu0 0.0
        %600 = vmatpush1.msra.mxu0 0.0
        %601 = vmatprep.subr.mxu0 0.0
        %602 = vmatpush1.msra.mxu0 0.0
        %603 = vmatprep.subr.mxu0 0.0
        %604 = vmatpush1.msra.mxu0 0.0
        %605 = vmatprep.subr.mxu0 0.0
        %606 = vmatpush1.msra.mxu0 0.0
        %607 = vmatprep.subr.mxu0 0.0
        %608 = vmatpush1.msra.mxu0 0.0
        %609 = vmatprep.subr.mxu0 0.0
        %610 = vmatpush1.msra.mxu0 0.0
        %611 = vmatprep.subr.mxu0 0.0
        %612 = vmatpush1.msra.mxu0 0.0
        %613 = vmatprep.subr.mxu0 0.0
        %614 = vmatpush1.msra.mxu0 0.0
        %615 = vmatprep.subr.mxu0 0.0
        %616 = vmatpush1.msra.mxu0 0.0
        %617 = vmatprep.subr.mxu0 0.0
        %618 = vmatpush1.msra.mxu0 0.0
        %619 = vmatprep.subr.mxu0 0.0
        %620 = vmatpush1.msra.mxu0 0.0
        %621 = vmatprep.subr.mxu0 0.0
        %622 = vmatpush1.msra.mxu0 0.0
        %623 = vmatprep.subr.mxu0 0.0
        %624 = vmatpush1.msra.mxu0 0.0
        %625 = vmatprep.subr.mxu0 0.0
        %626 = vmatpush1.msra.mxu0 0.0
        %627 = vmatprep.subr.mxu0 0.0
        %628 = vmatpush1.msra.mxu0 0.0
        %629 = vmatprep.subr.mxu0 0.0
        %630 = vmatpush1.msra.mxu0 0.0
        %631 = vmatprep.subr.mxu0 0.0
        %632 = vmatpush1.msra.mxu0 0.0
        %633 = vmatprep.subr.mxu0 0.0
        %634 = vmatpush1.msra.mxu0 0.0
        %635 = vmatprep.subr.mxu0 0.0
        %636 = vmatpush1.msra.mxu0 0.0
        %637 = vmatprep.subr.mxu0 0.0
        %638 = vmatpush1.msra.mxu0 0.0
        %639 = vmatprep.subr.mxu0 0.0
        %640 = vmatpush1.msra.mxu0 0.0
        %641 = vmatprep.subr.mxu0 0.0
        %642 = vmatpush1.msra.mxu0 0.0
        %643 = vmatprep.subr.mxu0 0.0
        %644 = vmatpush1.msra.mxu0 0.0
        %645 = vmatprep.subr.mxu0 0.0
        %646 = vmatpush1.msra.mxu0 0.0
        %647 = vmatprep.subr.mxu0 0.0
        %648 = vmatpush1.msra.mxu0 0.0
        %649 = vmatprep.subr.mxu0 0.0
        %650 = vmatpush1.msra.mxu0 0.0
        %651 = vmatprep.subr.mxu0 0.0
        %652 = vmatpush1.msra.mxu0 0.0
        %653 = vmatprep.subr.mxu0 0.0
        %654 = vmatpush1.msra.mxu0 0.0
        %655 = vmatprep.subr.mxu0 0.0
        %656 = vmatpush1.msra.mxu0 0.0
        %657 = vmatprep.subr.mxu0 0.0
        %658 = vmatpush1.msra.mxu0 0.0
        %659 = vmatprep.subr.mxu0 0.0
        %660 = vmatpush1.msra.mxu0 0.0
        %661 = vmatprep.mubr.f32.mxu0 0.0
        %662 = vmatmul.mubr.f32.gmra.mrb[0].mxu0 %v318
        %v663 = vpop.f32.mrb[0].mxu0
        %v664 = vadd.f32 %v304, %v663
        %v665 = vpop.f32.mrb[0].mxu0
        %666 = vmatprep.mubr.f32.mxu0 0.0
        %667 = vmatmul.mubr.f32.gmra.mrb[0].mxu0 %v321
        %v668 = vpop.f32.mrb[0].mxu0
        %v669 = vadd.f32 %v309, %v668
        %v670 = vpop.f32.mrb[0].mxu0
        %671 = vmatprep.mubr.f32.mxu0 0.0
        %672 = vmatmul.mubr.f32.gmra.mrb[0].mxu0 %v324
        %v673 = vpop.f32.mrb[0].mxu0
        %v674 = vadd.f32 %v314, %v673
        %v675 = vpop.f32.mrb[0].mxu0
        %676 = vdwg.mxu0
        %677 = vst [vmem:[%s279 + $0x3] sm:$0x1] %v664
        %678 = vst [vmem:[%s293 - $0x3] sm:$0x40] %v674
        %v679 = vmul.f32 %v674, 1.442695
        %v680 = vpow.pop %v679
        %v681 = vmul.f32 %v397, %v397
        %v682 = vmul.f32 %v402, %v402
        %v683 = vmul.f32 %v407, %v407
        %vm687 = vcmask 1046528
        %v688 = vrot.slane %v681, 1
        %v689 = vrot.slane %v682, 1
        %v690 = vsel %vm687, %v688, %v689
        %v691 = vrot.slane %v683, 1
        %v692 = vsel %vm687, %v689, %v691
        %v696 = vadd.f32 %v690, %v692
        %vm697 = vcmask 1043456
        %v698 = vsel %vm697, %v691, 0.0
        %v699 = vadd.f32 %v696, %v698
        %v700 = vrot.slane %v699, 4
        %v701 = vadd.f32 %v699, %v700
        %v702 = vrot.slane %v701, 2
        %v703 = vadd.f32 %v701, %v702
        %v704 = vrot.slane %v703, 1
        %v705 = vadd.f32 %v703, %v704
        %v706 = vadd.f32 %v705, %v413
        %707 = vst [vmem:[%s286 - $0x5] sm:$0x20] %v706
        %v708 = vmul.f32 %v397, %v486
        %v709 = vmul.f32 %v402, %v491
        %v710 = vmul.f32 %v407, %v496
        %v714 = vrot.slane %v708, 1
        %v715 = vrot.slane %v709, 1
        %v716 = vsel %vm687, %v714, %v715
        %v717 = vrot.slane %v710, 1
        %v718 = vsel %vm687, %v715, %v717
        %v722 = vadd.f32 %v716, %v718
        %v723 = vsel %vm697, %v717, 0.0
        %v724 = vadd.f32 %v722, %v723
        %v725 = vrot.slane %v724, 4
        %v726 = vadd.f32 %v724, %v725
        %v727 = vrot.slane %v726, 2
        %v728 = vadd.f32 %v726, %v727
        %v729 = vrot.slane %v728, 1
        %v730 = vadd.f32 %v728, %v729
        %731 = vst [vmem:[%s286 + $0x1] sm:$0x1] %v730
        %s732 = scalar_lea.vmem %s286, 4 [#allocation5]
        %733 = vst [vmem:[%s732] sm:$0x1] %v730
        %v734 = vmul.f32 %v397, %v575
        %v735 = vmul.f32 %v402, %v580
        %v736 = vmul.f32 %v407, %v585
        %v740 = vrot.slane %v734, 1
        %v741 = vrot.slane %v735, 1
        %v742 = vsel %vm687, %v740, %v741
        %v743 = vrot.slane %v736, 1
        %v744 = vsel %vm687, %v741, %v743
        %v748 = vadd.f32 %v742, %v744
        %v749 = vsel %vm697, %v743, 0.0
        %v750 = vadd.f32 %v748, %v749
        %v751 = vrot.slane %v750, 4
        %v752 = vadd.f32 %v750, %v751
        %v753 = vrot.slane %v752, 2
        %v754 = vadd.f32 %v752, %v753
        %v755 = vrot.slane %v754, 1
        %v756 = vadd.f32 %v754, %v755
        %757 = vst [vmem:[%s286 + $0x2] sm:$0x1] %v756
        %s758 = scalar_lea.vmem %s286, 8 [#allocation5]
        %759 = vst [vmem:[%s758] sm:$0x1] %v756
        %v760 = vmul.f32 %v397, %v664
        %v761 = vmul.f32 %v402, %v669
        %v762 = vmul.f32 %v407, %v674
        %v766 = vrot.slane %v760, 1
        %v767 = vrot.slane %v761, 1
        %v768 = vsel %vm687, %v766, %v767
        %v769 = vrot.slane %v762, 1
        %v770 = vsel %vm687, %v767, %v769
        %v774 = vadd.f32 %v768, %v770
        %v775 = vsel %vm697, %v769, 0.0
        %v776 = vadd.f32 %v774, %v775
        %v777 = vrot.slane %v776, 4
        %v778 = vadd.f32 %v776, %v777
        %v779 = vrot.slane %v778, 2
        %v780 = vadd.f32 %v778, %v779
        %v781 = vrot.slane %v780, 1
        %v782 = vadd.f32 %v780, %v781
        %783 = vst [vmem:[%s286 + $0x3] sm:$0x1] %v782
        %s784 = scalar_lea.vmem %s286, 12 [#allocation5]
        %785 = vst [vmem:[%s784] sm:$0x1] %v782
        %v786 = vmul.f32 %v486, %v486
        %v787 = vmul.f32 %v491, %v491
        %v788 = vmul.f32 %v496, %v496
        %v792 = vrot.slane %v786, 1
        %v793 = vrot.slane %v787, 1
        %v794 = vsel %vm687, %v792, %v793
        %v795 = vrot.slane %v788, 1
        %v796 = vsel %vm687, %v793, %v795
        %v800 = vadd.f32 %v794, %v796
        %v801 = vsel %vm697, %v795, 0.0
        %v802 = vadd.f32 %v800, %v801
        %v803 = vrot.slane %v802, 4
        %v804 = vadd.f32 %v802, %v803
        %v805 = vrot.slane %v804, 2
        %v806 = vadd.f32 %v804, %v805
        %v807 = vrot.slane %v806, 1
        %v808 = vadd.f32 %v806, %v807
        %v809 = vadd.f32 %v808, %v502
        %810 = vst [vmem:[%s732 - $0x4] sm:$0x20] %v809
        %v811 = vmul.f32 %v486, %v575
        %v812 = vmul.f32 %v491, %v580
        %v813 = vmul.f32 %v496, %v585
        %v817 = vrot.slane %v811, 1
        %v818 = vrot.slane %v812, 1
        %v819 = vsel %vm687, %v817, %v818
        %v820 = vrot.slane %v813, 1
        %v821 = vsel %vm687, %v818, %v820
        %v825 = vadd.f32 %v819, %v821
        %v826 = vsel %vm697, %v820, 0.0
        %v827 = vadd.f32 %v825, %v826
        %v828 = vrot.slane %v827, 4
        %v829 = vadd.f32 %v827, %v828
        %v830 = vrot.slane %v829, 2
        %v831 = vadd.f32 %v829, %v830
        %v832 = vrot.slane %v831, 1
        %v833 = vadd.f32 %v831, %v832
        %834 = vst [vmem:[%s732 + $0x2] sm:$0x1] %v833
        %835 = vst [vmem:[%s758 + $0x1] sm:$0x1] %v833
        %v836 = vmul.f32 %v486, %v664
        %v837 = vmul.f32 %v491, %v669
        %v838 = vmul.f32 %v496, %v674
        %v842 = vrot.slane %v836, 1
        %v843 = vrot.slane %v837, 1
        %v844 = vsel %vm687, %v842, %v843
        %v845 = vrot.slane %v838, 1
        %v846 = vsel %vm687, %v843, %v845
        %v850 = vadd.f32 %v844, %v846
        %v851 = vsel %vm697, %v845, 0.0
        %v852 = vadd.f32 %v850, %v851
        %v853 = vrot.slane %v852, 4
        %v854 = vadd.f32 %v852, %v853
        %v855 = vrot.slane %v854, 2
        %v856 = vadd.f32 %v854, %v855
        %v857 = vrot.slane %v856, 1
        %v858 = vadd.f32 %v856, %v857
        %859 = vst [vmem:[%s732 + $0x3] sm:$0x1] %v858
        %860 = vst [vmem:[%s784 + $0x1] sm:$0x1] %v858
        %v861 = vmul.f32 %v575, %v575
        %v862 = vmul.f32 %v580, %v580
        %v863 = vmul.f32 %v585, %v585
        %v867 = vrot.slane %v861, 1
        %v868 = vrot.slane %v862, 1
        %v869 = vsel %vm687, %v867, %v868
        %v870 = vrot.slane %v863, 1
        %v871 = vsel %vm687, %v868, %v870
        %v875 = vadd.f32 %v869, %v871
        %v876 = vsel %vm697, %v870, 0.0
        %v877 = vadd.f32 %v875, %v876
        %v878 = vrot.slane %v877, 4
        %v879 = vadd.f32 %v877, %v878
        %v880 = vrot.slane %v879, 2
        %v881 = vadd.f32 %v879, %v880
        %v882 = vrot.slane %v881, 1
        %v883 = vadd.f32 %v881, %v882
        %v884 = vadd.f32 %v883, %v591
        %885 = vst [vmem:[%s758 - $0x3] sm:$0x20] %v884
        %v886 = vmul.f32 %v575, %v664
        %v887 = vmul.f32 %v580, %v669
        %v888 = vmul.f32 %v585, %v674
        %v892 = vrot.slane %v886, 1
        %v893 = vrot.slane %v887, 1
        %v894 = vsel %vm687, %v892, %v893
        %v895 = vrot.slane %v888, 1
        %v896 = vsel %vm687, %v893, %v895
        %v900 = vadd.f32 %v894, %v896
        %v901 = vsel %vm697, %v895, 0.0
        %v902 = vadd.f32 %v900, %v901
        %v903 = vrot.slane %v902, 4
        %v904 = vadd.f32 %v902, %v903
        %v905 = vrot.slane %v904, 2
        %v906 = vadd.f32 %v904, %v905
        %v907 = vrot.slane %v906, 1
        %v908 = vadd.f32 %v906, %v907
        %909 = vst [vmem:[%s758 + $0x3] sm:$0x1] %v908
        %910 = vst [vmem:[%s784 + $0x2] sm:$0x1] %v908
        %v911 = vmul.f32 %v664, %v664
        %v912 = vmul.f32 %v669, %v669
        %v913 = vmul.f32 %v674, %v674
        %v917 = vrot.slane %v911, 1
        %v918 = vrot.slane %v912, 1
        %v919 = vsel %vm687, %v917, %v918
        %v920 = vrot.slane %v913, 1
        %v921 = vsel %vm687, %v918, %v920
        %v925 = vadd.f32 %v919, %v921
        %v926 = vsel %vm697, %v920, 0.0
        %v927 = vadd.f32 %v925, %v926
        %v928 = vrot.slane %v927, 4
        %v929 = vadd.f32 %v927, %v928
        %v930 = vrot.slane %v929, 2
        %v931 = vadd.f32 %v929, %v930
        %v932 = vrot.slane %v931, 1
        %v933 = vadd.f32 %v931, %v932
        %v934 = vadd.f32 %v933, %v680
        %935 = vst [vmem:[%s784 - $0x2] sm:$0x20] %v934
        %s936 = sand.u32 %s99, 1
        %s937 = scalar_lea.sflag [#allocation4], %s936
        %s938 = sand.u32 %s99, 1
        %s939 = smul.addr %s938, 4
        %s940 = scalar_lea.vmem [#allocation3], %s939
        %s941 = sand.u32 %s23, 1
        %s942 = scalar_lea.sflag [#allocation6], %s941
        %s943 = sand.u32 %s125, 1
        %s944 = smul.addr %s943, 16
        %s945 = scalar_lea.vmem [#allocation5], %s944
        %s946 = sand.u32 %s23, 1
        %s947 = scalar_lea.sflag [#allocation6], %s946
        %s948 = sand.u32 %s151, 1
        %s949 = smul.addr %s948, 4
        %s950 = scalar_lea.vmem [#allocation7], %s949
        // Predicated region
        $region74: #{tpu_custom_call.1} parent=68 // pred_check
          %p951 = pneg %p109
        $region75: #{tpu_custom_call.1} parent=68 // pred_check_branch
          %953 = sbr.rel (%p951) target = $region77
        $region76: #{tpu_custom_call.1} parent=68 // pred_region
          %s955 = ssub.s32 64, 64
          %956 = vsyncadd %s937, %s955
          %s957 = smul.addr %s23, 64
          %s958 = scalar_lea.hbm %s3, %s957
          %s960 = sshll.u32 %s940, 4
          %s961 = int_to_ptr.vmem [resolvable:$true] %s960
          %963 = dma.vmem_to_hbm [thread:$0]  %s961, 64, %s958, %s937
        $region77: #{tpu_custom_call.1} parent=68 // pred_fallthru
          _
        // Predicated region
        $region78: #{tpu_custom_call.1} parent=68 // pred_check
          %p964 = pneg %p135
        $region79: #{tpu_custom_call.1} parent=68 // pred_check_branch
          %966 = sbr.rel (%p964) target = $region81
        $region80: #{tpu_custom_call.1} parent=68 // pred_region
          %s968 = ssub.s32 256, 256
          %969 = vsyncadd %s942, %s968
          %s970 = smul.addr %s23, 64
          %s971 = scalar_lea.hbm %s4, %s970
          %s972 = sshll.u32 %s945, 4
          %s973 = int_to_ptr.vmem [resolvable:$true] %s972
          %978 = dma.vmem_to_hbm [thread:$0]  %s973, 256, %s971, %s942, 64, 128, 4
        $region81: #{tpu_custom_call.1} parent=68 // pred_fallthru
          _
        // Predicated region
        $region82: #{tpu_custom_call.1} parent=68 // pred_check
          %p979 = pneg %p161
        $region83: #{tpu_custom_call.1} parent=68 // pred_check_branch
          %981 = sbr.rel (%p979) target = $region85
        $region84: #{tpu_custom_call.1} parent=68 // pred_region
          %s983 = ssub.s32 64, 64
          %984 = vsyncadd %s947, %s983
          %s985 = smul.addr %s23, 64
          %s986 = scalar_lea.hbm %s5, %s985
          %s988 = sshll.u32 %s950, 4
          %s989 = int_to_ptr.vmem [resolvable:$true] %s988
          %991 = dma.vmem_to_hbm [thread:$0]  %s989, 64, %s986, %s947
        $region85: #{tpu_custom_call.1} parent=68 // pred_fallthru
          _
      $region69: #{tpu_custom_call.1} parent=5 // pred_fallthru
        _
      %p992 = scmp.le.s32.totalorder 2, %s18
      // Predicated region
      $region86: #{tpu_custom_call.1} parent=5 // pred_check
        %p993 = pneg %p992
      $region87: #{tpu_custom_call.1} parent=5 // pred_check_branch
        %995 = sbr.rel (%p993) target = $region89
      $region88: #{tpu_custom_call.1} parent=5 // pred_region
        %s996 = ssub.s32 %s18, 2
        // Predicated region
        $region90: #{tpu_custom_call.1} parent=88 // pred_check
          %p997 = pneg %p115
        $region91: #{tpu_custom_call.1} parent=88 // pred_check_branch
          %999 = sbr.rel (%p997) target = $region93
        $region92: #{tpu_custom_call.1} parent=88 // pred_region
          %s1000 = sand.u32 %s100, 1
          %s1001 = scalar_lea.sflag [#allocation4], %s1000
          %s1002 = sand.u32 %s100, 1
          %s1003 = smul.addr %s1002, 4
          %s1004 = scalar_lea.vmem [#allocation3], %s1003
          %1005 = dma.done %s1001, 64
        $region93: #{tpu_custom_call.1} parent=88 // pred_fallthru
          _
        // Predicated region
        $region94: #{tpu_custom_call.1} parent=88 // pred_check
          %p1006 = pneg %p141
        $region95: #{tpu_custom_call.1} parent=88 // pred_check_branch
          %1008 = sbr.rel (%p1006) target = $region97
        $region96: #{tpu_custom_call.1} parent=88 // pred_region
          %s1009 = sand.u32 %s24, 1
          %s1010 = scalar_lea.sflag [#allocation6], %s1009
          %s1011 = sand.u32 %s126, 1
          %s1012 = smul.addr %s1011, 16
          %s1013 = scalar_lea.vmem [#allocation5], %s1012
          %1014 = dma.done %s1010, 256
        $region97: #{tpu_custom_call.1} parent=88 // pred_fallthru
          _
        // Predicated region
        $region98: #{tpu_custom_call.1} parent=88 // pred_check
          %p1015 = pneg %p167
        $region99: #{tpu_custom_call.1} parent=88 // pred_check_branch
          %1017 = sbr.rel (%p1015) target = $region101
        $region100: #{tpu_custom_call.1} parent=88 // pred_region
          %s1018 = sand.u32 %s24, 1
          %s1019 = scalar_lea.sflag [#allocation6], %s1018
          %s1020 = sand.u32 %s152, 1
          %s1021 = smul.addr %s1020, 4
          %s1022 = scalar_lea.vmem [#allocation7], %s1021
          %1023 = dma.done %s1019, 64
        $region101: #{tpu_custom_call.1} parent=88 // pred_fallthru
          _
      $region89: #{tpu_custom_call.1} parent=5 // pred_fallthru
        _
    $region6: #{tpu_custom_call.1} parent=1 // loop_footer
      %s22 = sadd.s32 1, %s18
    $region7: #{tpu_custom_call.1} parent=1 // loop_footer_branch
      %17 = sbr.rel target = $region3
    $region8: #{tpu_custom_call.1} parent=1 // loop_exit
      _
    %1024 = vsyncpa [#allocation4], 1
    %s1025 = scalar_lea.sflag [#allocation4], 1
    %1026 = vsyncpa %s1025, 1
    %1027 = vsyncpa [#allocation6], 1
    %s1028 = scalar_lea.sflag [#allocation6], 1
    %1029 = vsyncpa %s1028, 1

</llo_original>
